<compile_context>
chip_gen: v6e
topology: v6e:2x2x1
jax: 0.10.0
libtpu: 0.0.40
codegen_flags: <defaults>
</compile_context>

<pallas_src>
import jax
import jax.numpy as jnp
from jax.experimental import pallas as pl
from jax.experimental.pallas import tpu as pltpu


def _mlp_kernel(x_ref, w0_ref, b0_ref, w1_ref, b1_ref, w2_ref, b2_ref, o_ref):
    x = x_ref[...]                                         # (TB, F), f32 or bf16

    # dense0 + ReLU.  Only K-nontrivial matmul; f32 accumulation on the MXU.
    h0 = jnp.dot(x, w0_ref[...], preferred_element_type=jnp.float32)
    h0 = jnp.maximum(h0 + b0_ref[...], 0.0)                # (TB, 10) f32

    # dropout(p=0.5): identity in eval mode.

    # dense1 + ReLU  (tiny K=10 / N=5: cost is noise; keep it on the MXU).
    h1 = jnp.dot(h0, w1_ref[...], preferred_element_type=jnp.float32) + b1_ref[...]
    h1 = jnp.maximum(h1, 0.0)                              # (TB, 5)

    # output linear  (K=5 / N=1)
    logits = jnp.dot(h1, w2_ref[...], preferred_element_type=jnp.float32) + b2_ref[...]

    # Softmax over the length-1 last dim: exp(x - max) = exp(0) = 1 and the
    # sum/divide are identities, so the cross-lane reduce + reciprocal are
    # dropped.  Written as exp(logits - logits) so the result is bit-exact vs.
    # jax.nn.softmax and the MLP feeding it is not dead code.  Rows of an
    # unpadded partial last block are garbage (possibly NaN) but are per-row
    # only and never written back to HBM.
    o_ref[...] = jnp.exp(logits - logits)                  # (TB, 1) == 1.0


def _round_up(n, m):
    return ((n + m - 1) // m) * m


def _pick_batch_tile(batch, n_features):
    """Batch tile: multiple of 8, sized so the double-buffered X block stays
    ~2 MiB per buffer with lane padding accounted for, and clamped so the grid
    keeps >= 2 steps (both v7x TensorCores get work) whenever batch allows."""
    # VMEM bytes per row of the streamed X block: last dim pads to 128 lanes.
    bytes_per_row = 4 * _round_up(max(n_features, 1), 128)
    per_buffer_budget = 2 * 1024 * 1024            # x2 for double buffering
    cap = max(8, (per_buffer_budget // bytes_per_row) // 8 * 8)
    # Keep at least two grid steps so dimension_semantics=("parallel",) can
    # shard the batch across v7x's two TensorCores.
    two_step = max(8, _round_up(pl.cdiv(batch, 2), 8))
    return max(8, min(cap, two_step))


def test_module_forward(x, params, *, block_batch=None):
    """x: (B, F) float32 or bfloat16. params: (in,out) weights and (1,out) biases (f32)."""
    batch, n_features = x.shape
    tb = block_batch if block_batch is not None else _pick_batch_tile(batch, n_features)
    tb = max(8, _round_up(tb, 8))
    tb = min(tb, _round_up(batch, 8))          # never larger than the (rounded) batch

    w0 = params["w0"]
    if x.dtype == jnp.bfloat16:
        # X is already stored bf16 in HBM (halves the only large HBM stream);
        # cast the tiny resident w0 once so the matmul runs native bf16 on the
        # MXU with f32 accumulation.  Bias add / ReLU stay f32.
        w0 = w0.astype(jnp.bfloat16)

    const = lambda i: (0, 0)   # weights/biases: single block, resident across grid

    x_bytes = int(x.size) * x.dtype.itemsize
    w_bytes = sum(int(p.size) * 4 for p in params.values())
    cost = pl.CostEstimate(
        flops=2 * batch * (n_features * 10 + 10 * 5 + 5 * 1),
        transcendentals=batch,
        bytes_accessed=x_bytes + w_bytes + 4 * batch,
    )

    # No jnp.pad for ragged batches: grid = cdiv(B, tb) over the unpadded X,
    # Pallas masks the partial last block (no extra HBM read/write pass).
    out = pl.pallas_call(
        _mlp_kernel,
        out_shape=jax.ShapeDtypeStruct((batch, 1), jnp.float32),
        grid=(pl.cdiv(batch, tb),),
        in_specs=[
            pl.BlockSpec((tb, n_features), lambda i: (i, 0)),   # X streamed over batch
            pl.BlockSpec(w0.shape, const),
            pl.BlockSpec(params["b0"].shape, const),
            pl.BlockSpec(params["w1"].shape, const),
            pl.BlockSpec(params["b1"].shape, const),
            pl.BlockSpec(params["w2"].shape, const),
            pl.BlockSpec(params["b2"].shape, const),
        ],
        # (tb, 1) output: writeback traffic is <= 1/F of the input read traffic;
        # a lane-dense layout would need an in-kernel relayout or a cross-row
        # reduce that unpadded partial blocks would poison, for no measurable gain.
        out_specs=pl.BlockSpec((tb, 1), lambda i: (i, 0)),
        compiler_params=pltpu.CompilerParams(
            dimension_semantics=("parallel",),       # megacore-shard batch on v7x
            vmem_limit_bytes=32 * 1024 * 1024,       # <= physical on v5e/v6e/v7x
        ),
        cost_estimate=cost,
    )(
        x,
        w0, params["b0"],
        params["w1"], params["b1"],
        params["w2"], params["b2"],
    )
    return out


def init_params(key, n_features):
    """Deterministic init mirroring nn.Linear default: U(-1/sqrt(fan_in), 1/sqrt(fan_in))."""
    dims = [(n_features, 10), (10, 5), (5, 1)]
    params = {}
    keys = jax.random.split(key, 2 * len(dims))
    for i, (fan_in, fan_out) in enumerate(dims):
        bound = 1.0 / jnp.sqrt(jnp.float32(fan_in))
        params[f"w{i}"] = jax.random.uniform(
            keys[2 * i], (fan_in, fan_out), jnp.float32, -bound, bound
        )
        params[f"b{i}"] = jax.random.uniform(
            keys[2 * i + 1], (1, fan_out), jnp.float32, -bound, bound
        )
    return params


def reference_forward(x, params):
    """Plain-JAX reference of the same forward pass (eval mode)."""
    h0 = jnp.maximum(x @ params["w0"] + params["b0"], 0.0)
    h1 = jnp.maximum(h0 @ params["w1"] + params["b1"], 0.0)
    logits = h1 @ params["w2"] + params["b2"]
    return jax.nn.softmax(logits, axis=-1)


if __name__ == "__main__":
    key = jax.random.PRNGKey(0)
    k_x, k_p, k_x2 = jax.random.split(key, 3)

    B, F = 8, 16
    x = jax.random.normal(k_x, (B, F), jnp.float32)
    params = init_params(k_p, F)

    out = jax.block_until_ready(test_module_forward(x, params))
    ref = reference_forward(x, params)
    assert out.shape == (B, 1), out.shape
    assert jnp.allclose(out, ref, atol=1e-5, rtol=1e-5), (out, ref)

    # Ragged batch with a forced small tile: multi-step (pipelined, megacore-
    # shardable) batch grid with an UNPADDED partial last block.
    B2 = 13
    x2 = jax.random.normal(k_x2, (B2, F), jnp.float32)
    out2 = jax.block_until_ready(test_module_forward(x2, params, block_batch=8))
    ref2 = reference_forward(x2, params)
    assert out2.shape == (B2, 1), out2.shape
    assert jnp.allclose(out2, ref2, atol=1e-5, rtol=1e-5), (out2, ref2)

    # bf16-streamed input path (X stored bf16 in HBM upstream; f32 accumulation).
    x_bf16 = x.astype(jnp.bfloat16)
    out3 = jax.block_until_ready(test_module_forward(x_bf16, params))
    ref3 = reference_forward(x_bf16.astype(jnp.float32), params)
    assert out3.shape == (B, 1), out3.shape
    assert jnp.allclose(out3, ref3, atol=1e-2, rtol=1e-2), (out3, ref3)

    print("KERNEL_OK")
</pallas_src>

<mosaic_0001>
module attributes {stable_mosaic.version = 11 : i64} {
  func.func @_mlp_kernel(%arg0: i32, %arg1: memref<8x16xf32, #tpu.memory_space<vmem>>, %arg2: memref<16x10xf32, #tpu.memory_space<vmem>>, %arg3: memref<1x10xf32, #tpu.memory_space<vmem>>, %arg4: memref<10x5xf32, #tpu.memory_space<vmem>>, %arg5: memref<1x5xf32, #tpu.memory_space<vmem>>, %arg6: memref<5x1xf32, #tpu.memory_space<vmem>>, %arg7: memref<1x1xf32, #tpu.memory_space<vmem>>, %arg8: memref<8x1xf32, #tpu.memory_space<vmem>>) attributes {dimension_semantics = [#tpu.dimension_semantics<parallel>], iteration_bounds = array<i64: 1>, scalar_prefetch = 0 : i64, scratch_operands = 0 : i64, tpu.core_type = #tpu.core_type<tc>, window_params = [{transform_indices = @transform_0, window_bounds = array<i64: 8, 16>}, {pipeline_mode = #tpu.pipeline_mode<synchronous>, transform_indices = @transform_1, window_bounds = array<i64: 16, 10>}, {pipeline_mode = #tpu.pipeline_mode<synchronous>, transform_indices = @transform_2, window_bounds = array<i64: 1, 10>}, {pipeline_mode = #tpu.pipeline_mode<synchronous>, transform_indices = @transform_3, window_bounds = array<i64: 10, 5>}, {pipeline_mode = #tpu.pipeline_mode<synchronous>, transform_indices = @transform_4, window_bounds = array<i64: 1, 5>}, {pipeline_mode = #tpu.pipeline_mode<synchronous>, transform_indices = @transform_5, window_bounds = array<i64: 5, 1>}, {pipeline_mode = #tpu.pipeline_mode<synchronous>, transform_indices = @transform_6, window_bounds = array<i64: 1, 1>}, {transform_indices = @transform_7, window_bounds = array<i64: 8, 1>}]} {
    %c0 = arith.constant 0 : index
    %c0_0 = arith.constant 0 : index
    %0 = vector.load %arg1[%c0, %c0_0] : memref<8x16xf32, #tpu.memory_space<vmem>>, vector<8x16xf32>
    %c0_1 = arith.constant 0 : index
    %c0_2 = arith.constant 0 : index
    %1 = vector.load %arg2[%c0_1, %c0_2] : memref<16x10xf32, #tpu.memory_space<vmem>>, vector<16x10xf32>
    %cst = arith.constant dense<0.000000e+00> : vector<8x10xf32>
    %2 = tpu.matmul %0, %1, %cst {dimension_numbers = #tpu.dot_dimension_numbers<[1], [0], [0], [1], [0, 0, 1, 1], [], []>} : vector<8x16xf32>, vector<16x10xf32>, vector<8x10xf32> -> vector<8x10xf32>
    %c0_3 = arith.constant 0 : index
    %c0_4 = arith.constant 0 : index
    %3 = vector.load %arg3[%c0_3, %c0_4] : memref<1x10xf32, #tpu.memory_space<vmem>>, vector<1x10xf32>
    %4 = vector.broadcast %3 : vector<1x10xf32> to vector<8x10xf32>
    %5 = arith.addf %2, %4 : vector<8x10xf32>
    %cst_5 = arith.constant 0.000000e+00 : f32
    %6 = vector.broadcast %cst_5 : f32 to vector<8x10xf32>
    %7 = arith.maximumf %5, %6 : vector<8x10xf32>
    %c0_6 = arith.constant 0 : index
    %c0_7 = arith.constant 0 : index
    %8 = vector.load %arg4[%c0_6, %c0_7] : memref<10x5xf32, #tpu.memory_space<vmem>>, vector<10x5xf32>
    %cst_8 = arith.constant dense<0.000000e+00> : vector<8x5xf32>
    %9 = tpu.matmul %7, %8, %cst_8 {dimension_numbers = #tpu.dot_dimension_numbers<[1], [0], [0], [1], [0, 0, 1, 1], [], []>} : vector<8x10xf32>, vector<10x5xf32>, vector<8x5xf32> -> vector<8x5xf32>
    %c0_9 = arith.constant 0 : index
    %c0_10 = arith.constant 0 : index
    %10 = vector.load %arg5[%c0_9, %c0_10] : memref<1x5xf32, #tpu.memory_space<vmem>>, vector<1x5xf32>
    %11 = vector.broadcast %10 : vector<1x5xf32> to vector<8x5xf32>
    %12 = arith.addf %9, %11 : vector<8x5xf32>
    %cst_11 = arith.constant 0.000000e+00 : f32
    %13 = vector.broadcast %cst_11 : f32 to vector<8x5xf32>
    %14 = arith.maximumf %12, %13 : vector<8x5xf32>
    %c0_12 = arith.constant 0 : index
    %c0_13 = arith.constant 0 : index
    %15 = vector.load %arg6[%c0_12, %c0_13] : memref<5x1xf32, #tpu.memory_space<vmem>>, vector<5x1xf32>
    %cst_14 = arith.constant dense<0.000000e+00> : vector<8x1xf32>
    %16 = tpu.matmul %14, %15, %cst_14 {dimension_numbers = #tpu.dot_dimension_numbers<[1], [0], [0], [1], [0, 0, 1, 1], [], []>} : vector<8x5xf32>, vector<5x1xf32>, vector<8x1xf32> -> vector<8x1xf32>
    %c0_15 = arith.constant 0 : index
    %c0_16 = arith.constant 0 : index
    %17 = vector.load %arg7[%c0_15, %c0_16] : memref<1x1xf32, #tpu.memory_space<vmem>>, vector<1x1xf32>
    %18 = vector.broadcast %17 : vector<1x1xf32> to vector<8x1xf32>
    %19 = arith.addf %16, %18 : vector<8x1xf32>
    %20 = arith.subf %19, %19 : vector<8x1xf32>
    %21 = math.exp %20 : vector<8x1xf32>
    %c0_17 = arith.constant 0 : index
    %c0_18 = arith.constant 0 : index
    %22 = vector.load %arg8[%c0_17, %c0_18] : memref<8x1xf32, #tpu.memory_space<vmem>>, vector<8x1xf32>
    tpu.vector_store %arg8[%c0_17, %c0_18], %21 {strides = array<i32>} : memref<8x1xf32, #tpu.memory_space<vmem>>, vector<8x1xf32>,
    return
  }
  func.func @transform_0(%arg0: i32) -> (i32, i32) {
    %c0_i32 = arith.constant 0 : i32
    %c0_i32_0 = arith.constant 0 : i32
    return %arg0, %c0_i32 : i32, i32
  }
  func.func @transform_1(%arg0: i32) -> (i32, i32) {
    %c0_i32 = arith.constant 0 : i32
    %c0_i32_0 = arith.constant 0 : i32
    %c0_i32_1 = arith.constant 0 : i32
    return %c0_i32, %c0_i32_0 : i32, i32
  }
  func.func @transform_2(%arg0: i32) -> (i32, i32) {
    %c0_i32 = arith.constant 0 : i32
    %c0_i32_0 = arith.constant 0 : i32
    %c0_i32_1 = arith.constant 0 : i32
    return %c0_i32, %c0_i32_0 : i32, i32
  }
  func.func @transform_3(%arg0: i32) -> (i32, i32) {
    %c0_i32 = arith.constant 0 : i32
    %c0_i32_0 = arith.constant 0 : i32
    %c0_i32_1 = arith.constant 0 : i32
    return %c0_i32, %c0_i32_0 : i32, i32
  }
  func.func @transform_4(%arg0: i32) -> (i32, i32) {
    %c0_i32 = arith.constant 0 : i32
    %c0_i32_0 = arith.constant 0 : i32
    %c0_i32_1 = arith.constant 0 : i32
    return %c0_i32, %c0_i32_0 : i32, i32
  }
  func.func @transform_5(%arg0: i32) -> (i32, i32) {
    %c0_i32 = arith.constant 0 : i32
    %c0_i32_0 = arith.constant 0 : i32
    %c0_i32_1 = arith.constant 0 : i32
    return %c0_i32, %c0_i32_0 : i32, i32
  }
  func.func @transform_6(%arg0: i32) -> (i32, i32) {
    %c0_i32 = arith.constant 0 : i32
    %c0_i32_0 = arith.constant 0 : i32
    %c0_i32_1 = arith.constant 0 : i32
    return %c0_i32, %c0_i32_0 : i32, i32
  }
  func.func @transform_7(%arg0: i32) -> (i32, i32) {
    %c0_i32 = arith.constant 0 : i32
    %c0_i32_0 = arith.constant 0 : i32
    return %arg0, %c0_i32 : i32, i32
  }
}

</mosaic_0001>

<llo_original>
// kernel: tpu_custom_call.1
$region0: #{tpu_custom_call.1}
  #allocation0 [shape = 'u32[]', space=smem, size = 0x4, offset = 0x4, fixed_abs, tag = 'smem constant byte address 0x4 - core index']
  #allocation1 [shape = 'u32[144,128]{1,0:T(1,128)}', space=vmem, size = 0x12000, scoped, tag = 'internal scratch']
  #allocation2 [shape = 'f32[1,1]{1,0:T(1,128)S(1)}', space=vmem, size = 0x200, scoped, tag = 'scoped memory for tpu_custom_call.1']
  %s0 = inlined_call_operand.vmem [shape: f32[8,16], index: 0, kind: input, shape index: {}]
  %s1 = inlined_call_operand.vmem [shape: f32[16,10], index: 1, kind: input, shape index: {}]
  %s2 = inlined_call_operand.vmem [shape: f32[1,10], index: 2, kind: input, shape index: {}]
  %s3 = inlined_call_operand.vmem [shape: f32[10,5], index: 3, kind: input, shape index: {}]
  %s4 = inlined_call_operand.vmem [shape: f32[1,5], index: 4, kind: input, shape index: {}]
  %s5 = inlined_call_operand.vmem [shape: f32[5,1], index: 5, kind: input, shape index: {}]
  %s6 = inlined_call_operand.<no memory space> [shape: f32[1,1], index: 6, kind: input, shape index: {}]
  %s7 = inlined_call_operand.vmem [shape: f32[8,1], index: 7, kind: output, shape index: {}]
  %s8 = sld [smem:[#allocation0]]
  $region38: #{tpu_custom_call.1} parent=0
    _
  %s10 = ssub.s32 1, %s8
  %s11 = scalar_select 0, %s10, %s8
  %v12 = vstv %s6
  %13 = vst [vmem:[#allocation2] sm:$0x1] %v12
  // Predicated region
  $region2: #{tpu_custom_call.1} parent=0 // pred_check
    _
  $region3: #{tpu_custom_call.1} parent=0 // pred_check_branch
    %15 = sbr.rel (0) target = $region5
  $region4: #{tpu_custom_call.1} parent=0 // pred_region
    _
  $region5: #{tpu_custom_call.1} parent=0 // pred_fallthru
    _
  // Predicated region
  $region6: #{tpu_custom_call.1} parent=0 // pred_check
    _
  $region7: #{tpu_custom_call.1} parent=0 // pred_check_branch
    %17 = sbr.rel (0) target = $region9
  $region8: #{tpu_custom_call.1} parent=0 // pred_region
    _
  $region9: #{tpu_custom_call.1} parent=0 // pred_fallthru
    _
  // Predicated region
  $region10: #{tpu_custom_call.1} parent=0 // pred_check
    _
  $region11: #{tpu_custom_call.1} parent=0 // pred_check_branch
    %19 = sbr.rel (0) target = $region13
  $region12: #{tpu_custom_call.1} parent=0 // pred_region
    _
  $region13: #{tpu_custom_call.1} parent=0 // pred_fallthru
    _
  // Predicated region
  $region14: #{tpu_custom_call.1} parent=0 // pred_check
    _
  $region15: #{tpu_custom_call.1} parent=0 // pred_check_branch
    %21 = sbr.rel (0) target = $region17
  $region16: #{tpu_custom_call.1} parent=0 // pred_region
    _
  $region17: #{tpu_custom_call.1} parent=0 // pred_fallthru
    _
  // Predicated region
  $region18: #{tpu_custom_call.1} parent=0 // pred_check
    _
  $region19: #{tpu_custom_call.1} parent=0 // pred_check_branch
    %23 = sbr.rel (0) target = $region21
  $region20: #{tpu_custom_call.1} parent=0 // pred_region
    _
  $region21: #{tpu_custom_call.1} parent=0 // pred_fallthru
    _
  // Predicated region
  $region22: #{tpu_custom_call.1} parent=0 // pred_check
    _
  $region23: #{tpu_custom_call.1} parent=0 // pred_check_branch
    %25 = sbr.rel (0) target = $region25
  $region24: #{tpu_custom_call.1} parent=0 // pred_region
    _
  $region25: #{tpu_custom_call.1} parent=0 // pred_fallthru
    _
  // Predicated region
  $region26: #{tpu_custom_call.1} parent=0 // pred_check
    _
  $region27: #{tpu_custom_call.1} parent=0 // pred_check_branch
    %27 = sbr.rel (0) target = $region29
  $region28: #{tpu_custom_call.1} parent=0 // pred_region
    _
  $region29: #{tpu_custom_call.1} parent=0 // pred_fallthru
    _
  %v28 = vld [vmem:[%s0] sm:$0xff]
  %v29 = vld [vmem:[%s1] sm:$0xff]
  %v30 = vld [vmem:[%s1 + $0x8] sm:$0xff]
  %v31 = vld [vmem:[%s2] sm:$0x1]
  %v33 = vlaneseq
  %v34 = vshrl.u32 %v33, 7
  %v35 = vsub.s32 0, %v34
  %v36 = vrot.slane %v31, %v35
  %vm38 = vcmask 130048
  %v40 = vsel %vm38, %v28, 0
  %42 = vmatprep.subr.mxu0 0.0
  %43 = vmatpush1.msra.mxu0 0.0
  %44 = vmatprep.subr.mxu0 0.0
  %45 = vmatpush1.msra.mxu0 0.0
  %46 = vmatprep.subr.mxu0 0.0
  %47 = vmatpush1.msra.mxu0 0.0
  %48 = vmatprep.subr.mxu0 0.0
  %49 = vmatpush1.msra.mxu0 0.0
  %50 = vmatprep.subr.mxu0 0.0
  %51 = vmatpush1.msra.mxu0 0.0
  %52 = vmatprep.subr.mxu0 0.0
  %53 = vmatpush1.msra.mxu0 0.0
  %54 = vmatprep.subr.mxu0 0.0
  %55 = vmatpush1.msra.mxu0 0.0
  %56 = vmatprep.subr.mxu0 0.0
  %57 = vmatpush1.msra.mxu0 0.0
  %58 = vmatprep.subr.mxu0 0.0
  %59 = vmatpush1.msra.mxu0 0.0
  %60 = vmatprep.subr.mxu0 0.0
  %61 = vmatpush1.msra.mxu0 0.0
  %62 = vmatprep.subr.mxu0 0.0
  %63 = vmatpush1.msra.mxu0 0.0
  %64 = vmatprep.subr.mxu0 0.0
  %65 = vmatpush1.msra.mxu0 0.0
  %66 = vmatprep.subr.mxu0 0.0
  %67 = vmatpush1.msra.mxu0 0.0
  %68 = vmatprep.subr.mxu0 0.0
  %69 = vmatpush1.msra.mxu0 0.0
  %70 = vmatprep.subr.mxu0 0.0
  %71 = vmatpush1.msra.mxu0 %v30
  %72 = vmatprep.subr.mxu0 0.0
  %73 = vmatpush1.msra.mxu0 %v29
  %74 = vmatprep.subr.mxu0 0.0
  %75 = vmatpush2.msra.mxu0 0.0
  %76 = vmatprep.subr.mxu0 0.0
  %77 = vmatpush2.msra.mxu0 0.0
  %78 = vmatprep.subr.mxu0 0.0
  %79 = vmatpush2.msra.mxu0 0.0
  %80 = vmatprep.subr.mxu0 0.0
  %81 = vmatpush2.msra.mxu0 0.0
  %82 = vmatprep.subr.mxu0 0.0
  %83 = vmatpush2.msra.mxu0 0.0
  %84 = vmatprep.subr.mxu0 0.0
  %85 = vmatpush2.msra.mxu0 0.0
  %86 = vmatprep.subr.mxu0 0.0
  %87 = vmatpush2.msra.mxu0 0.0
  %88 = vmatprep.subr.mxu0 0.0
  %89 = vmatpush2.msra.mxu0 0.0
  %90 = vmatprep.subr.mxu0 0.0
  %91 = vmatpush2.msra.mxu0 0.0
  %92 = vmatprep.subr.mxu0 0.0
  %93 = vmatpush2.msra.mxu0 0.0
  %94 = vmatprep.subr.mxu0 0.0
  %95 = vmatpush2.msra.mxu0 0.0
  %96 = vmatprep.subr.mxu0 0.0
  %97 = vmatpush2.msra.mxu0 0.0
  %98 = vmatprep.subr.mxu0 0.0
  %99 = vmatpush2.msra.mxu0 0.0
  %100 = vmatprep.subr.mxu0 0.0
  %101 = vmatpush2.msra.mxu0 0.0
  %102 = vmatprep.subr.mxu0 0.0
  %103 = vmatpush2.msra.mxu0 0.0
  %104 = vmatprep.subr.mxu0 0.0
  %105 = vmatpush2.msra.mxu0 0.0
  %106 = vmatprep.mubr.f32.mxu0 0.0
  %107 = vmatmul.mubr.f32.gmra.mxu0 %v40
  %v108 = vpop.f32.mrf.mxu0
  %v109 = vadd.f32 %v36, %v108
  %v110 = vpop.f32.mrf.mxu0
  %111 = vdwg.mxu0
  %v112 = vmax.f32 %v109, 0.0
  %v113 = vld [vmem:[%s3] sm:$0xff]
  %v114 = vld [vmem:[%s3 + $0x8] sm:$0x3]
  %v115 = vld [vmem:[%s4] sm:$0x1]
  %v117 = vlaneseq
  %v118 = vshrl.u32 %v117, 7
  %v119 = vsub.s32 0, %v118
  %v120 = vrot.slane %v115, %v119
  %vm122 = vcmask 80896
  %v124 = vsel %vm122, %v112, 0
  %vm126 = vcmask 1041408
  %v128 = vsel %vm126, %v114, 0
  %130 = vmatprep.subr.mxu0 0.0
  %131 = vmatpush1.msra.mxu0 0.0
  %132 = vmatprep.subr.mxu0 0.0
  %133 = vmatpush1.msra.mxu0 0.0
  %134 = vmatprep.subr.mxu0 0.0
  %135 = vmatpush1.msra.mxu0 0.0
  %136 = vmatprep.subr.mxu0 0.0
  %137 = vmatpush1.msra.mxu0 0.0
  %138 = vmatprep.subr.mxu0 0.0
  %139 = vmatpush1.msra.mxu0 0.0
  %140 = vmatprep.subr.mxu0 0.0
  %141 = vmatpush1.msra.mxu0 0.0
  %142 = vmatprep.subr.mxu0 0.0
  %143 = vmatpush1.msra.mxu0 0.0
  %144 = vmatprep.subr.mxu0 0.0
  %145 = vmatpush1.msra.mxu0 0.0
  %146 = vmatprep.subr.mxu0 0.0
  %147 = vmatpush1.msra.mxu0 0.0
  %148 = vmatprep.subr.mxu0 0.0
  %149 = vmatpush1.msra.mxu0 0.0
  %150 = vmatprep.subr.mxu0 0.0
  %151 = vmatpush1.msra.mxu0 0.0
  %152 = vmatprep.subr.mxu0 0.0
  %153 = vmatpush1.msra.mxu0 0.0
  %154 = vmatprep.subr.mxu0 0.0
  %155 = vmatpush1.msra.mxu0 0.0
  %156 = vmatprep.subr.mxu0 0.0
  %157 = vmatpush1.msra.mxu0 0.0
  %158 = vmatprep.subr.mxu0 0.0
  %159 = vmatpush1.msra.mxu0 %v128
  %160 = vmatprep.subr.mxu0 0.0
  %161 = vmatpush1.msra.mxu0 %v113
  %162 = vmatprep.subr.mxu0 0.0
  %163 = vmatpush2.msra.mxu0 0.0
  %164 = vmatprep.subr.mxu0 0.0
  %165 = vmatpush2.msra.mxu0 0.0
  %166 = vmatprep.subr.mxu0 0.0
  %167 = vmatpush2.msra.mxu0 0.0
  %168 = vmatprep.subr.mxu0 0.0
  %169 = vmatpush2.msra.mxu0 0.0
  %170 = vmatprep.subr.mxu0 0.0
  %171 = vmatpush2.msra.mxu0 0.0
  %172 = vmatprep.subr.mxu0 0.0
  %173 = vmatpush2.msra.mxu0 0.0
  %174 = vmatprep.subr.mxu0 0.0
  %175 = vmatpush2.msra.mxu0 0.0
  %176 = vmatprep.subr.mxu0 0.0
  %177 = vmatpush2.msra.mxu0 0.0
  %178 = vmatprep.subr.mxu0 0.0
  %179 = vmatpush2.msra.mxu0 0.0
  %180 = vmatprep.subr.mxu0 0.0
  %181 = vmatpush2.msra.mxu0 0.0
  %182 = vmatprep.subr.mxu0 0.0
  %183 = vmatpush2.msra.mxu0 0.0
  %184 = vmatprep.subr.mxu0 0.0
  %185 = vmatpush2.msra.mxu0 0.0
  %186 = vmatprep.subr.mxu0 0.0
  %187 = vmatpush2.msra.mxu0 0.0
  %188 = vmatprep.subr.mxu0 0.0
  %189 = vmatpush2.msra.mxu0 0.0
  %190 = vmatprep.subr.mxu0 0.0
  %191 = vmatpush2.msra.mxu0 0.0
  %192 = vmatprep.subr.mxu0 0.0
  %193 = vmatpush2.msra.mxu0 0.0
  %194 = vmatprep.mubr.f32.mxu0 0.0
  %195 = vmatmul.mubr.f32.gmra.mxu0 %v124
  %v196 = vpop.f32.mrf.mxu0
  %v197 = vadd.f32 %v120, %v196
  %v198 = vpop.f32.mrf.mxu0
  %199 = vdwg.mxu0
  %v200 = vmax.f32 %v197, 0.0
  %v201 = vld [vmem:[%s5] sm:$0x1f]
  %v202 = vld [vmem:[#allocation2] sm:$0x1]
  %v204 = vlaneseq
  %v205 = vshrl.u32 %v204, 7
  %v206 = vsub.s32 0, %v205
  %v207 = vrot.slane %v202, %v206
  %vm209 = vcmask 39936
  %v211 = vsel %vm209, %v200, 0
  %vm213 = vcmask 1044480
  %v215 = vsel %vm213, %v201, 0
  %217 = vmatprep.subr.mxu0 0.0
  %218 = vmatpush1.msra.mxu0 0.0
  %219 = vmatprep.subr.mxu0 0.0
  %220 = vmatpush1.msra.mxu0 0.0
  %221 = vmatprep.subr.mxu0 0.0
  %222 = vmatpush1.msra.mxu0 0.0
  %223 = vmatprep.subr.mxu0 0.0
  %224 = vmatpush1.msra.mxu0 0.0
  %225 = vmatprep.subr.mxu0 0.0
  %226 = vmatpush1.msra.mxu0 0.0
  %227 = vmatprep.subr.mxu0 0.0
  %228 = vmatpush1.msra.mxu0 0.0
  %229 = vmatprep.subr.mxu0 0.0
  %230 = vmatpush1.msra.mxu0 0.0
  %231 = vmatprep.subr.mxu0 0.0
  %232 = vmatpush1.msra.mxu0 0.0
  %233 = vmatprep.subr.mxu0 0.0
  %234 = vmatpush1.msra.mxu0 0.0
  %235 = vmatprep.subr.mxu0 0.0
  %236 = vmatpush1.msra.mxu0 0.0
  %237 = vmatprep.subr.mxu0 0.0
  %238 = vmatpush1.msra.mxu0 0.0
  %239 = vmatprep.subr.mxu0 0.0
  %240 = vmatpush1.msra.mxu0 0.0
  %241 = vmatprep.subr.mxu0 0.0
  %242 = vmatpush1.msra.mxu0 0.0
  %243 = vmatprep.subr.mxu0 0.0
  %244 = vmatpush1.msra.mxu0 0.0
  %245 = vmatprep.subr.mxu0 0.0
  %246 = vmatpush1.msra.mxu0 0.0
  %247 = vmatprep.subr.mxu0 0.0
  %248 = vmatpush1.msra.mxu0 %v215
  %249 = vmatprep.subr.mxu0 0.0
  %250 = vmatpush2.msra.mxu0 0.0
  %251 = vmatprep.subr.mxu0 0.0
  %252 = vmatpush2.msra.mxu0 0.0
  %253 = vmatprep.subr.mxu0 0.0
  %254 = vmatpush2.msra.mxu0 0.0
  %255 = vmatprep.subr.mxu0 0.0
  %256 = vmatpush2.msra.mxu0 0.0
  %257 = vmatprep.subr.mxu0 0.0
  %258 = vmatpush2.msra.mxu0 0.0
  %259 = vmatprep.subr.mxu0 0.0
  %260 = vmatpush2.msra.mxu0 0.0
  %261 = vmatprep.subr.mxu0 0.0
  %262 = vmatpush2.msra.mxu0 0.0
  %263 = vmatprep.subr.mxu0 0.0
  %264 = vmatpush2.msra.mxu0 0.0
  %265 = vmatprep.subr.mxu0 0.0
  %266 = vmatpush2.msra.mxu0 0.0
  %267 = vmatprep.subr.mxu0 0.0
  %268 = vmatpush2.msra.mxu0 0.0
  %269 = vmatprep.subr.mxu0 0.0
  %270 = vmatpush2.msra.mxu0 0.0
  %271 = vmatprep.subr.mxu0 0.0
  %272 = vmatpush2.msra.mxu0 0.0
  %273 = vmatprep.subr.mxu0 0.0
  %274 = vmatpush2.msra.mxu0 0.0
  %275 = vmatprep.subr.mxu0 0.0
  %276 = vmatpush2.msra.mxu0 0.0
  %277 = vmatprep.subr.mxu0 0.0
  %278 = vmatpush2.msra.mxu0 0.0
  %279 = vmatprep.subr.mxu0 0.0
  %280 = vmatpush2.msra.mxu0 0.0
  %281 = vmatprep.mubr.f32.mxu0 0.0
  %282 = vmatmul.mubr.f32.gmra.mxu0 %v211
  %v283 = vpop.f32.mrf.mxu0
  %v284 = vadd.f32 %v207, %v283
  %v285 = vpop.f32.mrf.mxu0
  %286 = vdwg.mxu0
  %v287 = vsub.f32 %v284, %v284
  %v288 = vmul.f32 %v287, 1.442695
  %v289 = vpow.pop %v288
  %vm290 = vcmask 7168
  %291 = vst.msk [vmem:[%s7] sm:$0xff] %vm290, %v289
  // Predicated region
  $region30: #{tpu_custom_call.1} parent=0 // pred_check
    _
  $region31: #{tpu_custom_call.1} parent=0 // pred_check_branch
    %293 = sbr.rel (0) target = $region33
  $region32: #{tpu_custom_call.1} parent=0 // pred_region
    _
  $region33: #{tpu_custom_call.1} parent=0 // pred_fallthru
    _
  // Predicated region
  $region34: #{tpu_custom_call.1} parent=0 // pred_check
    _
  $region35: #{tpu_custom_call.1} parent=0 // pred_check_branch
    %295 = sbr.rel (0) target = $region37
  $region36: #{tpu_custom_call.1} parent=0 // pred_region
    _
  $region37: #{tpu_custom_call.1} parent=0 // pred_fallthru
    _

</llo_original>
